<compile_context>
chip_gen: v7x
topology: tpu7x:2x2x1
jax: 0.10.0
libtpu: 0.0.40
codegen_flags: <defaults>
</compile_context>

<pallas_src>
import jax
import jax.numpy as jnp
from jax.experimental import pallas as pl
from jax.experimental.pallas import tpu as pltpu

NEG_SLOPE = 0.01  # nn.LeakyReLU default


def _leaky_relu(x):
    return jnp.where(x > 0, x, NEG_SLOPE * x)


def _round_up(a, m):
    return (a + m - 1) // m * m


def qoe_mlp_kernel(x_ref, w1_ref, b1_ref, w2_ref, b2_ref, w3p_ref, o_ref):
    x = x_ref[...]                                    # (TB, 4)

    # ---- Layer 1: Linear(4, 64) as 4 broadcast FMAs on the VPU (K=4 would
    #      leave the MXU ~97% empty while still paying push/drain cost).
    h1 = x[:, 0:1] * w1_ref[0:1, :]                   # (TB, 64)
    h1 = h1 + x[:, 1:2] * w1_ref[1:2, :]
    h1 = h1 + x[:, 2:3] * w1_ref[2:3, :]
    h1 = h1 + x[:, 3:4] * w1_ref[3:4, :]
    h1 = _leaky_relu(h1 + b1_ref[...])                # (TB, 64)

    # ---- Layer 2: Linear(64, 64) on the MXU.
    h2 = jnp.dot(h1, w2_ref[...], preferred_element_type=jnp.float32)
    h2 = _leaky_relu(h2 + b2_ref[...])                # (TB, 64)

    # ---- Layer 3: Linear(64, 1) zero-padded to N=128 -> lane-dense store.
    y = jnp.dot(h2, w3p_ref[...], preferred_element_type=jnp.float32)
    o_ref[...] = y.astype(o_ref.dtype)                # (TB, 128)


def qoe_predictor_forward(x, params, *, tile_b=512):
    """x: (B, 4) float32 -> (B, 1) float32."""
    w1, b1, w2, b2, w3, b3 = params
    B = x.shape[0]

    # Pick a batch tile: multiple of 8, big enough to amortize per-step
    # pipeline overhead, but small enough to keep >= 2 grid steps (v7x has
    # 2 TensorCores that get work via the parallel grid axis).
    if B >= 16:
        cap = _round_up(max(B // 2, 8), 8)
    else:
        cap = _round_up(max(B, 1), 8)
    tile_b = min(_round_up(max(tile_b, 8), 8), cap)

    # Pad the batch so the grid covers it exactly; extra rows are discarded.
    B_pad = _round_up(B, tile_b)
    if B_pad != B:
        x = jnp.pad(x, ((0, B_pad - B), (0, 0)))
    grid = (B_pad // tile_b,)

    # Zero-pad the last weight to a full 128-lane output so the kernel writes
    # dense (tile_b, 128) blocks instead of masked 1-wide partial stores.
    w3_pad = jnp.pad(w3, ((0, 0), (0, 128 - w3.shape[1])))

    # Weights/biases are tiny: give every grid step the full tensor.
    full = lambda shape: pl.BlockSpec(shape, lambda i: (0, 0))

    out = pl.pallas_call(
        qoe_mlp_kernel,
        out_shape=jax.ShapeDtypeStruct((B_pad, 128), jnp.float32),
        grid_spec=pltpu.PrefetchScalarGridSpec(
            num_scalar_prefetch=0,
            grid=grid,
            in_specs=[
                pl.BlockSpec((tile_b, 4), lambda i: (i, 0)),   # x tile
                full(w1.shape),                                # (4, 64)
                full(b1.shape),                                # (1, 64)
                full(w2.shape),                                # (64, 64)
                full(b2.shape),                                # (1, 64)
                full(w3_pad.shape),                            # (64, 128)
            ],
            out_specs=pl.BlockSpec((tile_b, 128), lambda i: (i, 0)),
        ),
        compiler_params=pltpu.CompilerParams(
            dimension_semantics=("parallel",)),
    )(x, w1, b1, w2, b2, w3_pad)

    # Column 0 holds the real output; fold the scalar bias here.
    return out[:B, :1] + b3


def init_params(key):
    """Deterministic synthetic weights, stored as (in, out) for the kernel."""
    ks = jax.random.split(key, 6)
    w1 = jax.random.uniform(ks[0], (4, 64), jnp.float32, -0.5, 0.5)
    b1 = jax.random.uniform(ks[1], (1, 64), jnp.float32, -0.5, 0.5)
    w2 = jax.random.uniform(ks[2], (64, 64), jnp.float32, -0.125, 0.125)
    b2 = jax.random.uniform(ks[3], (1, 64), jnp.float32, -0.125, 0.125)
    w3 = jax.random.uniform(ks[4], (64, 1), jnp.float32, -0.125, 0.125)
    b3 = jax.random.uniform(ks[5], (1, 1), jnp.float32, -0.125, 0.125)
    return (w1, b1, w2, b2, w3, b3)


def reference_forward(x, params):
    w1, b1, w2, b2, w3, b3 = params
    h1 = jax.nn.leaky_relu(x @ w1 + b1, NEG_SLOPE)
    h2 = jax.nn.leaky_relu(h1 @ w2 + b2, NEG_SLOPE)
    return h2 @ w3 + b3


if __name__ == "__main__":
    key = jax.random.PRNGKey(0)
    kx, kp = jax.random.split(key)
    B = 16
    x = jax.random.normal(kx, (B, 4), jnp.float32)
    params = init_params(kp)

    y = qoe_predictor_forward(x, params)
    y = jax.block_until_ready(y)

    y_ref = reference_forward(x, params)
    assert y.shape == (B, 1)
    assert jnp.allclose(y, y_ref, atol=1e-5, rtol=1e-5), "mismatch vs reference"

    # Also exercise a larger, non-multiple batch to cover padding/tiling path.
    B2 = 1000
    x2 = jax.random.normal(jax.random.PRNGKey(1), (B2, 4), jnp.float32)
    y2 = jax.block_until_ready(qoe_predictor_forward(x2, params))
    assert y2.shape == (B2, 1)
    assert jnp.allclose(y2, reference_forward(x2, params), atol=1e-5, rtol=1e-5)

    print("KERNEL_OK")
</pallas_src>

<mosaic_0001>
module attributes {stable_mosaic.version = 11 : i64} {
  func.func @qoe_mlp_kernel(%arg0: i32, %arg1: memref<8x4xf32, #tpu.memory_space<vmem>>, %arg2: memref<4x64xf32, #tpu.memory_space<vmem>>, %arg3: memref<1x64xf32, #tpu.memory_space<vmem>>, %arg4: memref<64x64xf32, #tpu.memory_space<vmem>>, %arg5: memref<1x64xf32, #tpu.memory_space<vmem>>, %arg6: memref<64x128xf32, #tpu.memory_space<vmem>>, %arg7: memref<8x128xf32, #tpu.memory_space<vmem>>) attributes {dimension_semantics = [#tpu.dimension_semantics<parallel>], iteration_bounds = array<i64: 2>, scalar_prefetch = 0 : i64, scratch_operands = 0 : i64, tpu.core_type = #tpu.core_type<tc>, window_params = [{transform_indices = @transform_0, window_bounds = array<i64: 8, 4>}, {pipeline_mode = #tpu.pipeline_mode<synchronous>, transform_indices = @transform_1, window_bounds = array<i64: 4, 64>}, {pipeline_mode = #tpu.pipeline_mode<synchronous>, transform_indices = @transform_2, window_bounds = array<i64: 1, 64>}, {pipeline_mode = #tpu.pipeline_mode<synchronous>, transform_indices = @transform_3, window_bounds = array<i64: 64, 64>}, {pipeline_mode = #tpu.pipeline_mode<synchronous>, transform_indices = @transform_4, window_bounds = array<i64: 1, 64>}, {pipeline_mode = #tpu.pipeline_mode<synchronous>, transform_indices = @transform_5, window_bounds = array<i64: 64, 128>}, {transform_indices = @transform_6, window_bounds = array<i64: 8, 128>}]} {
    %c0 = arith.constant 0 : index
    %c0_0 = arith.constant 0 : index
    %0 = vector.load %arg1[%c0, %c0_0] : memref<8x4xf32, #tpu.memory_space<vmem>>, vector<8x4xf32>
    %1 = vector.extract_strided_slice %0 {offsets = [0, 0], sizes = [8, 1], strides = [1, 1]} : vector<8x4xf32> to vector<8x1xf32>
    %c0_1 = arith.constant 0 : index
    %c0_2 = arith.constant 0 : index
    %2 = vector.load %arg2[%c0_1, %c0_2] : memref<4x64xf32, #tpu.memory_space<vmem>>, vector<1x64xf32>
    %3 = vector.broadcast %1 : vector<8x1xf32> to vector<8x64xf32>
    %4 = vector.broadcast %2 : vector<1x64xf32> to vector<8x64xf32>
    %5 = arith.mulf %3, %4 : vector<8x64xf32>
    %6 = vector.extract_strided_slice %0 {offsets = [0, 1], sizes = [8, 1], strides = [1, 1]} : vector<8x4xf32> to vector<8x1xf32>
    %c1 = arith.constant 1 : index
    %c0_3 = arith.constant 0 : index
    %7 = vector.load %arg2[%c1, %c0_3] : memref<4x64xf32, #tpu.memory_space<vmem>>, vector<1x64xf32>
    %8 = vector.broadcast %6 : vector<8x1xf32> to vector<8x64xf32>
    %9 = vector.broadcast %7 : vector<1x64xf32> to vector<8x64xf32>
    %10 = arith.mulf %8, %9 : vector<8x64xf32>
    %11 = arith.addf %5, %10 : vector<8x64xf32>
    %12 = vector.extract_strided_slice %0 {offsets = [0, 2], sizes = [8, 1], strides = [1, 1]} : vector<8x4xf32> to vector<8x1xf32>
    %c2 = arith.constant 2 : index
    %c0_4 = arith.constant 0 : index
    %13 = vector.load %arg2[%c2, %c0_4] : memref<4x64xf32, #tpu.memory_space<vmem>>, vector<1x64xf32>
    %14 = vector.broadcast %12 : vector<8x1xf32> to vector<8x64xf32>
    %15 = vector.broadcast %13 : vector<1x64xf32> to vector<8x64xf32>
    %16 = arith.mulf %14, %15 : vector<8x64xf32>
    %17 = arith.addf %11, %16 : vector<8x64xf32>
    %18 = vector.extract_strided_slice %0 {offsets = [0, 3], sizes = [8, 1], strides = [1, 1]} : vector<8x4xf32> to vector<8x1xf32>
    %c3 = arith.constant 3 : index
    %c0_5 = arith.constant 0 : index
    %19 = vector.load %arg2[%c3, %c0_5] : memref<4x64xf32, #tpu.memory_space<vmem>>, vector<1x64xf32>
    %20 = vector.broadcast %18 : vector<8x1xf32> to vector<8x64xf32>
    %21 = vector.broadcast %19 : vector<1x64xf32> to vector<8x64xf32>
    %22 = arith.mulf %20, %21 : vector<8x64xf32>
    %23 = arith.addf %17, %22 : vector<8x64xf32>
    %c0_6 = arith.constant 0 : index
    %c0_7 = arith.constant 0 : index
    %24 = vector.load %arg3[%c0_6, %c0_7] : memref<1x64xf32, #tpu.memory_space<vmem>>, vector<1x64xf32>
    %25 = vector.broadcast %24 : vector<1x64xf32> to vector<8x64xf32>
    %26 = arith.addf %23, %25 : vector<8x64xf32>
    %cst = arith.constant 0.000000e+00 : f32
    %27 = vector.broadcast %cst : f32 to vector<8x64xf32>
    %28 = arith.cmpf ogt, %26, %27 : vector<8x64xf32>
    %cst_8 = arith.constant 0.00999999977 : f32
    %29 = vector.broadcast %cst_8 : f32 to vector<8x64xf32>
    %30 = arith.mulf %29, %26 : vector<8x64xf32>
    %31 = arith.select %28, %26, %30 : vector<8x64xi1>, vector<8x64xf32>
    %c0_9 = arith.constant 0 : index
    %c0_10 = arith.constant 0 : index
    %32 = vector.load %arg4[%c0_9, %c0_10] : memref<64x64xf32, #tpu.memory_space<vmem>>, vector<64x64xf32>
    %cst_11 = arith.constant dense<0.000000e+00> : vector<8x64xf32>
    %33 = tpu.matmul %31, %32, %cst_11 {dimension_numbers = #tpu.dot_dimension_numbers<[1], [0], [0], [1], [0, 0, 1, 1], [], []>} : vector<8x64xf32>, vector<64x64xf32>, vector<8x64xf32> -> vector<8x64xf32>
    %c0_12 = arith.constant 0 : index
    %c0_13 = arith.constant 0 : index
    %34 = vector.load %arg5[%c0_12, %c0_13] : memref<1x64xf32, #tpu.memory_space<vmem>>, vector<1x64xf32>
    %35 = vector.broadcast %34 : vector<1x64xf32> to vector<8x64xf32>
    %36 = arith.addf %33, %35 : vector<8x64xf32>
    %cst_14 = arith.constant 0.000000e+00 : f32
    %37 = vector.broadcast %cst_14 : f32 to vector<8x64xf32>
    %38 = arith.cmpf ogt, %36, %37 : vector<8x64xf32>
    %cst_15 = arith.constant 0.00999999977 : f32
    %39 = vector.broadcast %cst_15 : f32 to vector<8x64xf32>
    %40 = arith.mulf %39, %36 : vector<8x64xf32>
    %41 = arith.select %38, %36, %40 : vector<8x64xi1>, vector<8x64xf32>
    %c0_16 = arith.constant 0 : index
    %c0_17 = arith.constant 0 : index
    %42 = vector.load %arg6[%c0_16, %c0_17] : memref<64x128xf32, #tpu.memory_space<vmem>>, vector<64x128xf32>
    %cst_18 = arith.constant dense<0.000000e+00> : vector<8x128xf32>
    %43 = tpu.matmul %41, %42, %cst_18 {dimension_numbers = #tpu.dot_dimension_numbers<[1], [0], [0], [1], [0, 0, 1, 1], [], []>} : vector<8x64xf32>, vector<64x128xf32>, vector<8x128xf32> -> vector<8x128xf32>
    %c0_19 = arith.constant 0 : index
    %c0_20 = arith.constant 0 : index
    %44 = vector.load %arg7[%c0_19, %c0_20] : memref<8x128xf32, #tpu.memory_space<vmem>>, vector<8x128xf32>
    tpu.vector_store %arg7[%c0_19, %c0_20], %43 {strides = array<i32>} : memref<8x128xf32, #tpu.memory_space<vmem>>, vector<8x128xf32>,
    return
  }
  func.func @transform_0(%arg0: i32) -> (i32, i32) {
    %c0_i32 = arith.constant 0 : i32
    %c0_i32_0 = arith.constant 0 : i32
    return %arg0, %c0_i32 : i32, i32
  }
  func.func @transform_1(%arg0: i32) -> (i32, i32) {
    %c0_i32 = arith.constant 0 : i32
    %c0_i32_0 = arith.constant 0 : i32
    %c0_i32_1 = arith.constant 0 : i32
    return %c0_i32, %c0_i32_0 : i32, i32
  }
  func.func @transform_2(%arg0: i32) -> (i32, i32) {
    %c0_i32 = arith.constant 0 : i32
    %c0_i32_0 = arith.constant 0 : i32
    %c0_i32_1 = arith.constant 0 : i32
    return %c0_i32, %c0_i32_0 : i32, i32
  }
  func.func @transform_3(%arg0: i32) -> (i32, i32) {
    %c0_i32 = arith.constant 0 : i32
    %c0_i32_0 = arith.constant 0 : i32
    %c0_i32_1 = arith.constant 0 : i32
    return %c0_i32, %c0_i32_0 : i32, i32
  }
  func.func @transform_4(%arg0: i32) -> (i32, i32) {
    %c0_i32 = arith.constant 0 : i32
    %c0_i32_0 = arith.constant 0 : i32
    %c0_i32_1 = arith.constant 0 : i32
    return %c0_i32, %c0_i32_0 : i32, i32
  }
  func.func @transform_5(%arg0: i32) -> (i32, i32) {
    %c0_i32 = arith.constant 0 : i32
    %c0_i32_0 = arith.constant 0 : i32
    %c0_i32_1 = arith.constant 0 : i32
    return %c0_i32, %c0_i32_0 : i32, i32
  }
  func.func @transform_6(%arg0: i32) -> (i32, i32) {
    %c0_i32 = arith.constant 0 : i32
    %c0_i32_0 = arith.constant 0 : i32
    return %arg0, %c0_i32 : i32, i32
  }
}

</mosaic_0001>

<llo_original>
// kernel: tpu_custom_call.1
$region0: #{tpu_custom_call.1}
  #allocation0 [shape = 'u32[]', space=smem, size = 0x4, offset = 0x4, fixed_abs, tag = 'smem constant byte address 0x4 - core index']
  #allocation1 [shape = 'u32[144,128]{1,0:T(1,128)}', space=vmem, size = 0x12000, scoped, tag = 'internal scratch']
  %s0 = inlined_call_operand.vmem [shape: f32[16,4], index: 0, kind: input, shape index: {}]
  %s1 = inlined_call_operand.vmem [shape: f32[4,64], index: 1, kind: input, shape index: {}]
  %s2 = inlined_call_operand.vmem [shape: f32[1,64], index: 2, kind: input, shape index: {}]
  %s3 = inlined_call_operand.hbm [shape: f32[64,64], index: 3, kind: input, shape index: {}]
  %s4 = inlined_call_operand.vmem [shape: f32[1,64], index: 4, kind: input, shape index: {}]
  %s5 = inlined_call_operand.hbm [shape: f32[64,128], index: 5, kind: input, shape index: {}]
  %s6 = inlined_call_operand.hbm [shape: f32[16,128], index: 6, kind: output, shape index: {}]
  %s7 = sld [smem:[#allocation0]]
  $region65: #{tpu_custom_call.1} parent=0
    _
  %s9 = ssub.s32 1, %s7
  %s10 = scalar_select 0, %s9, %s7
  $region1: #{tpu_custom_call.1} parent=0
    #allocation2 [shape = 'u8[32768]{0}', space=vmem, size = 0x8000, scoped, tag = 'input window, operand 3, single buffered']
    #allocation3 [shape = 's32[2]{0}', space=sflag, size = 0x8, scoped, tag = 'scoped memory for tpu_custom_call.1']
    #allocation4 [shape = 's32[2]{0}', space=sflag, size = 0x8, scoped, tag = 'scoped memory for tpu_custom_call.1']
    #allocation5 [shape = 'u8[32768]{0}', space=vmem, size = 0x8000, scoped, tag = 'input window, operand 5, single buffered']
    #allocation6 [shape = 's32[1]{0}', space=sflag, size = 0x4, scoped, tag = 'scoped memory for tpu_custom_call.1']
    #allocation7 [shape = 'u8[8192]{0}', space=vmem, size = 0x2000, scoped, tag = 'output window, operand 0']
    %11 = vsyncpa [#allocation3], 0
    %12 = vsyncpa [#allocation6], 0
    %13 = vsyncpa [#allocation4], 0
    %s14 = scalar_lea.sflag [#allocation4], 1
    %15 = vsyncpa %s14, 0
    loop: start=0, step=1, limit=4
    $region2: #{tpu_custom_call.1} parent=1 // loop_pre_header
      _
    $region3: #{tpu_custom_call.1} parent=1 // loop_header
      %s17 = sphi 0, %s21
      %p18 = scmp.ge.s32.totalorder %s17, 4
      %s27 = sphi 0, %s29
      %s30 = sphi 0, %s27
      %s31 = sphi 0, %s30
      %s47 = sphi 0, %s31
      %s51 = sphi 0, %s51
      %s53 = sphi 0, %s51
      %s54 = sphi 0, %s53
      %s68 = sphi 0, %s54
      %s72 = sphi 0, %s72
      %s74 = sphi 0, %s72
      %s75 = sphi 0, %s74
      %s89 = sphi 0, %s75
      %s93 = sphi 0, %s93
      %s95 = sphi 0, %s93
      %s96 = sphi 0, %s95
      %s110 = sphi 0, %s96
      %s114 = sphi 0, %s114
      %s116 = sphi 0, %s114
      %s117 = sphi 0, %s116
      %s131 = sphi 0, %s117
      %s135 = sphi 0, %s135
      %s137 = sphi 0, %s135
      %s138 = sphi 0, %s137
      %s152 = sphi 0, %s138
      %s158 = sphi 0, %s160
      %s161 = sphi 0, %s158
      %s162 = sphi 0, %s161
      %s178 = sphi 0, %s162
    $region4: #{tpu_custom_call.1} parent=1 // loop_header_branch
      %20 = sbr.rel (%p18) target = $region8
    $region5: #{tpu_custom_call.1} parent=1 // loop_body
      %s22 = ssub.s32 %s17, 1
      %s23 = ssub.s32 %s17, 2
      %s24 = sadd.s32 %s17, 1
      %s25 = ssub.s32 %s17, %s24
      %p26 = scmp.eq.s32.totalorder %s25, 0
      %s28 = sadd.s32 %s27, 1
      %s29 = scalar_select %p26, %s27, %s28
      %p32 = pneg %p26
      %p33 = scmp.eq.s32.totalorder %s17, 1
      %p34 = por %p32, %p33
      %p35 = scmp.ne.s32.totalorder %s27, %s30
      %p36 = scmp.eq.s32.totalorder %s17, 0
      %p37 = por %p35, %p36
      %p38 = scmp.ne.s32.totalorder %s27, %s30
      %p39 = scmp.eq.s32.totalorder %s22, 1
      %p40 = por %p38, %p39
      %p41 = scmp.ne.s32.totalorder %s30, %s31
      %p42 = scmp.eq.s32.totalorder %s22, 0
      %p43 = por %p41, %p42
      %p44 = scmp.ne.s32.totalorder %s30, %s31
      %p45 = scmp.eq.s32.totalorder %s23, 1
      %p46 = por %p44, %p45
      %p48 = scmp.ne.s32.totalorder %s31, %s47
      %p49 = scmp.eq.s32.totalorder %s23, 0
      %p50 = por %p48, %p49
      %s52 = sadd.s32 %s51, 1
      %p55 = scmp.eq.s32.totalorder %s17, 1
      %p56 = scmp.ne.s32.totalorder %s51, %s53
      %p57 = scmp.eq.s32.totalorder %s17, 0
      %p58 = por %p56, %p57
      %p59 = scmp.ne.s32.totalorder %s51, %s53
      %p60 = scmp.eq.s32.totalorder %s22, 1
      %p61 = por %p59, %p60
      %p62 = scmp.ne.s32.totalorder %s53, %s54
      %p63 = scmp.eq.s32.totalorder %s22, 0
      %p64 = por %p62, %p63
      %p65 = scmp.ne.s32.totalorder %s53, %s54
      %p66 = scmp.eq.s32.totalorder %s23, 1
      %p67 = por %p65, %p66
      %p69 = scmp.ne.s32.totalorder %s54, %s68
      %p70 = scmp.eq.s32.totalorder %s23, 0
      %p71 = por %p69, %p70
      %s73 = sadd.s32 %s72, 1
      %p76 = scmp.eq.s32.totalorder %s17, 1
      %p77 = scmp.ne.s32.totalorder %s72, %s74
      %p78 = scmp.eq.s32.totalorder %s17, 0
      %p79 = por %p77, %p78
      %p80 = scmp.ne.s32.totalorder %s72, %s74
      %p81 = scmp.eq.s32.totalorder %s22, 1
      %p82 = por %p80, %p81
      %p83 = scmp.ne.s32.totalorder %s74, %s75
      %p84 = scmp.eq.s32.totalorder %s22, 0
      %p85 = por %p83, %p84
      %p86 = scmp.ne.s32.totalorder %s74, %s75
      %p87 = scmp.eq.s32.totalorder %s23, 1
      %p88 = por %p86, %p87
      %p90 = scmp.ne.s32.totalorder %s75, %s89
      %p91 = scmp.eq.s32.totalorder %s23, 0
      %p92 = por %p90, %p91
      %s94 = sadd.s32 %s93, 1
      %p97 = scmp.eq.s32.totalorder %s17, 1
      %p98 = scmp.ne.s32.totalorder %s93, %s95
      %p99 = scmp.eq.s32.totalorder %s17, 0
      %p100 = por %p98, %p99
      %p101 = scmp.ne.s32.totalorder %s93, %s95
      %p102 = scmp.eq.s32.totalorder %s22, 1
      %p103 = por %p101, %p102
      %p104 = scmp.ne.s32.totalorder %s95, %s96
      %p105 = scmp.eq.s32.totalorder %s22, 0
      %p106 = por %p104, %p105
      %p107 = scmp.ne.s32.totalorder %s95, %s96
      %p108 = scmp.eq.s32.totalorder %s23, 1
      %p109 = por %p107, %p108
      %p111 = scmp.ne.s32.totalorder %s96, %s110
      %p112 = scmp.eq.s32.totalorder %s23, 0
      %p113 = por %p111, %p112
      %s115 = sadd.s32 %s114, 1
      %p118 = scmp.eq.s32.totalorder %s17, 1
      %p119 = scmp.ne.s32.totalorder %s114, %s116
      %p120 = scmp.eq.s32.totalorder %s17, 0
      %p121 = por %p119, %p120
      %p122 = scmp.ne.s32.totalorder %s114, %s116
      %p123 = scmp.eq.s32.totalorder %s22, 1
      %p124 = por %p122, %p123
      %p125 = scmp.ne.s32.totalorder %s116, %s117
      %p126 = scmp.eq.s32.totalorder %s22, 0
      %p127 = por %p125, %p126
      %p128 = scmp.ne.s32.totalorder %s116, %s117
      %p129 = scmp.eq.s32.totalorder %s23, 1
      %p130 = por %p128, %p129
      %p132 = scmp.ne.s32.totalorder %s117, %s131
      %p133 = scmp.eq.s32.totalorder %s23, 0
      %p134 = por %p132, %p133
      %s136 = sadd.s32 %s135, 1
      %p139 = scmp.eq.s32.totalorder %s17, 1
      %p140 = scmp.ne.s32.totalorder %s135, %s137
      %p141 = scmp.eq.s32.totalorder %s17, 0
      %p142 = por %p140, %p141
      %p143 = scmp.ne.s32.totalorder %s135, %s137
      %p144 = scmp.eq.s32.totalorder %s22, 1
      %p145 = por %p143, %p144
      %p146 = scmp.ne.s32.totalorder %s137, %s138
      %p147 = scmp.eq.s32.totalorder %s22, 0
      %p148 = por %p146, %p147
      %p149 = scmp.ne.s32.totalorder %s137, %s138
      %p150 = scmp.eq.s32.totalorder %s23, 1
      %p151 = por %p149, %p150
      %p153 = scmp.ne.s32.totalorder %s138, %s152
      %p154 = scmp.eq.s32.totalorder %s23, 0
      %p155 = por %p153, %p154
      %s156 = ssub.s32 %s17, %s24
      %p157 = scmp.eq.s32.totalorder %s156, 0
      %s159 = sadd.s32 %s158, 1
      %s160 = scalar_select %p157, %s158, %s159
      %p163 = pneg %p157
      %p164 = scmp.eq.s32.totalorder %s17, 1
      %p165 = por %p163, %p164
      %p166 = scmp.ne.s32.totalorder %s158, %s161
      %p167 = scmp.eq.s32.totalorder %s17, 0
      %p168 = por %p166, %p167
      %p169 = scmp.ne.s32.totalorder %s158, %s161
      %p170 = scmp.eq.s32.totalorder %s22, 1
      %p171 = por %p169, %p170
      %p172 = scmp.ne.s32.totalorder %s161, %s162
      %p173 = scmp.eq.s32.totalorder %s22, 0
      %p174 = por %p172, %p173
      %p175 = scmp.ne.s32.totalorder %s161, %s162
      %p176 = scmp.eq.s32.totalorder %s23, 1
      %p177 = por %p175, %p176
      %p179 = scmp.ne.s32.totalorder %s162, %s178
      %p180 = scmp.eq.s32.totalorder %s23, 0
      %p181 = por %p179, %p180
      %p182 = scmp.le.s32.totalorder 1, %s17
      %p183 = scmp.lt.s32.totalorder %s17, 3
      %p184 = pnand %p182, %p183
      %p185 = pneg %p184
      // Predicated region
      $region9: #{tpu_custom_call.1} parent=5 // pred_check
        _
      $region10: #{tpu_custom_call.1} parent=5 // pred_check_branch
        %187 = sbr.rel (%p184) target = $region12
      $region11: #{tpu_custom_call.1} parent=5 // pred_region
        %s188 = ssub.s32 %s17, 1
        // Predicated region
        $region13: #{tpu_custom_call.1} parent=11 // pred_check
          %p189 = pneg %p64
        $region14: #{tpu_custom_call.1} parent=11 // pred_check_branch
          %191 = sbr.rel (%p189) target = $region16
        $region15: #{tpu_custom_call.1} parent=11 // pred_region
          _
        $region16: #{tpu_custom_call.1} parent=11 // pred_fallthru
          _
        // Predicated region
        $region17: #{tpu_custom_call.1} parent=11 // pred_check
          %p192 = pneg %p85
        $region18: #{tpu_custom_call.1} parent=11 // pred_check_branch
          %194 = sbr.rel (%p192) target = $region20
        $region19: #{tpu_custom_call.1} parent=11 // pred_region
          _
        $region20: #{tpu_custom_call.1} parent=11 // pred_fallthru
          _
        // Predicated region
        $region21: #{tpu_custom_call.1} parent=11 // pred_check
          %p195 = pneg %p106
        $region22: #{tpu_custom_call.1} parent=11 // pred_check_branch
          %197 = sbr.rel (%p195) target = $region24
        $region23: #{tpu_custom_call.1} parent=11 // pred_region
          %s199 = ssub.s32 1024, 1024
          %200 = vsyncadd [#allocation3], %s199
          %s201 = sshll.u32 [#allocation2], 4
          %s202 = int_to_ptr.vmem [resolvable:$true] %s201
          %207 = dma.hbm_to_vmem [thread:$0]  %s3, 1024, %s202, [#allocation3], 128, 128, 8
        $region24: #{tpu_custom_call.1} parent=11 // pred_fallthru
          _
        // Predicated region
        $region25: #{tpu_custom_call.1} parent=11 // pred_check
          %p208 = pneg %p127
        $region26: #{tpu_custom_call.1} parent=11 // pred_check_branch
          %210 = sbr.rel (%p208) target = $region28
        $region27: #{tpu_custom_call.1} parent=11 // pred_region
          _
        $region28: #{tpu_custom_call.1} parent=11 // pred_fallthru
          _
        // Predicated region
        $region29: #{tpu_custom_call.1} parent=11 // pred_check
          %p211 = pneg %p148
        $region30: #{tpu_custom_call.1} parent=11 // pred_check_branch
          %213 = sbr.rel (%p211) target = $region32
        $region31: #{tpu_custom_call.1} parent=11 // pred_region
          %s215 = ssub.s32 1024, 1024
          %216 = vsyncadd [#allocation6], %s215
          %s217 = sshll.u32 [#allocation5], 4
          %s218 = int_to_ptr.vmem [resolvable:$true] %s217
          %223 = dma.hbm_to_vmem [thread:$0]  %s5, 1024, %s218, [#allocation6], 128, 128, 8
        $region32: #{tpu_custom_call.1} parent=11 // pred_fallthru
          _
      $region12: #{tpu_custom_call.1} parent=5 // pred_fallthru
        _
      %p224 = scmp.lt.s32.totalorder %s17, 2
      // Predicated region
      $region33: #{tpu_custom_call.1} parent=5 // pred_check
        %p225 = pneg %p224
      $region34: #{tpu_custom_call.1} parent=5 // pred_check_branch
        %227 = sbr.rel (%p225) target = $region36
      $region35: #{tpu_custom_call.1} parent=5 // pred_region
        // Predicated region
        $region37: #{tpu_custom_call.1} parent=35 // pred_check
          %p228 = pneg %p37
        $region38: #{tpu_custom_call.1} parent=35 // pred_check_branch
          %230 = sbr.rel (%p228) target = $region40
        $region39: #{tpu_custom_call.1} parent=35 // pred_region
          %p231 = scmp.lt.s32.totalorder %s17, 1
          %s232 = scalar_select %p231, %s17, 1
          %s233 = smul.addr %s232, 8
          %s234 = scalar_lea.vmem %s0, %s233
        $region40: #{tpu_custom_call.1} parent=35 // pred_fallthru
          _
      $region36: #{tpu_custom_call.1} parent=5 // pred_fallthru
        _
      %p235 = scmp.le.s32.totalorder 1, %s17
      %p236 = scmp.lt.s32.totalorder %s17, 3
      %p237 = pnand %p235, %p236
      %p238 = pneg %p237
      // Predicated region
      $region41: #{tpu_custom_call.1} parent=5 // pred_check
        _
      $region42: #{tpu_custom_call.1} parent=5 // pred_check_branch
        %240 = sbr.rel (%p237) target = $region44
      $region43: #{tpu_custom_call.1} parent=5 // pred_region
        %s241 = ssub.s32 %s17, 1
        // Predicated region
        $region45: #{tpu_custom_call.1} parent=43 // pred_check
          %p242 = pneg %p106
        $region46: #{tpu_custom_call.1} parent=43 // pred_check_branch
          %244 = sbr.rel (%p242) target = $region48
        $region47: #{tpu_custom_call.1} parent=43 // pred_region
          %245 = dma.done [#allocation3], 1024
        $region48: #{tpu_custom_call.1} parent=43 // pred_fallthru
          _
        // Predicated region
        $region49: #{tpu_custom_call.1} parent=43 // pred_check
          %p246 = pneg %p148
        $region50: #{tpu_custom_call.1} parent=43 // pred_check_branch
          %248 = sbr.rel (%p246) target = $region52
        $region51: #{tpu_custom_call.1} parent=43 // pred_region
          %249 = dma.done [#allocation6], 1024
        $region52: #{tpu_custom_call.1} parent=43 // pred_fallthru
          _
        %p250 = scmp.lt.s32.totalorder %s22, 1
        %s251 = scalar_select %p250, %s22, 1
        %s252 = smul.addr %s251, 8
        %s253 = scalar_lea.vmem %s0, %s252
        %p254 = pneg %p43
        %p255 = pneg %p40
        %p256 = pneg %p64
        %p257 = pneg %p61
        %p258 = pneg %p85
        %p259 = pneg %p82
        %p260 = pneg %p106
        %p261 = pneg %p103
        %p262 = pneg %p127
        %p263 = pneg %p124
        %p264 = pneg %p148
        %p265 = pneg %p145
        %p266 = pneg %p174
        %p267 = pneg %p171
        %s268 = sand.u32 %s161, 1
        %s269 = scalar_lea.sflag [#allocation4], %s268
        %s270 = sand.u32 %s161, 1
        %s271 = smul.addr %s270, 8
        %s272 = scalar_lea.vmem [#allocation7], %s271
        %p273 = scmp.lt.s32.totalorder %s22, 1
        %s274 = scalar_select %p273, %s22, 1
        %s275 = smul.addr %s274, 8
        %s276 = scalar_lea.vmem %s0, %s275
        %v277 = vld [vmem:[%s276] sm:$0xff]
        %v278 = vld [vmem:[%s1] sm:$0x1]
        %280 = vset.pattern.permute.xlu0 0
        %281 = vperm.xlu0 %280, %v277
        %v282 = vpop.permute.xlu0 %281
        %v284 = vlaneseq
        %v285 = vshrl.u32 %v284, 7
        %v286 = vsub.s32 0, %v285
        %v287 = vrot.slane %v278, %v286
        %v288 = vmul.f32 %v282, %v287
        %v289 = vld [vmem:[%s1 + $0x1] sm:$0x1]
        %290 = vset.pattern.permute.xlu0 1
        %291 = vperm.xlu0 %290, %v277
        %v292 = vpop.permute.xlu0 %291
        %v294 = vlaneseq
        %v295 = vshrl.u32 %v294, 7
        %v296 = vsub.s32 0, %v295
        %v297 = vrot.slane %v289, %v296
        %v298 = vmul.f32 %v292, %v297
        %v299 = vadd.f32 %v288, %v298
        %v300 = vld [vmem:[%s1 + $0x2] sm:$0x1]
        %301 = vset.pattern.permute.xlu0 2
        %302 = vperm.xlu0 %301, %v277
        %v303 = vpop.permute.xlu0 %302
        %v305 = vlaneseq
        %v306 = vshrl.u32 %v305, 7
        %v307 = vsub.s32 0, %v306
        %v308 = vrot.slane %v300, %v307
        %v309 = vmul.f32 %v303, %v308
        %v310 = vadd.f32 %v299, %v309
        %v311 = vld [vmem:[%s1 + $0x3] sm:$0x1]
        %312 = vset.pattern.permute.xlu0 3
        %313 = vperm.xlu0 %312, %v277
        %v314 = vpop.permute.xlu0 %313
        %v316 = vlaneseq
        %v317 = vshrl.u32 %v316, 7
        %v318 = vsub.s32 0, %v317
        %v319 = vrot.slane %v311, %v318
        %v320 = vmul.f32 %v314, %v319
        %v321 = vadd.f32 %v310, %v320
        %v322 = vld [vmem:[%s2] sm:$0x1]
        %v324 = vlaneseq
        %v325 = vshrl.u32 %v324, 7
        %v326 = vsub.s32 0, %v325
        %v327 = vrot.slane %v322, %v326
        %v329 = vadd.f32 %v321, %v327
        %vm330 = vcmp.gt.f32.partialorder %v329, 0.0
        %v331 = vmul.f32 %v329, 0.01
        %v332 = vsel %vm330, %v329, %v331
        %v333 = vld [vmem:[#allocation2] sm:$0xff]
        %v334 = vld [vmem:[#allocation2 + $0x8] sm:$0xff]
        %v335 = vld [vmem:[#allocation2 + $0x10] sm:$0xff]
        %v336 = vld [vmem:[#allocation2 + $0x18] sm:$0xff]
        %v337 = vld [vmem:[#allocation2 + $0x20] sm:$0xff]
        %v338 = vld [vmem:[#allocation2 + $0x28] sm:$0xff]
        %v339 = vld [vmem:[#allocation2 + $0x30] sm:$0xff]
        %v340 = vld [vmem:[#allocation2 + $0x38] sm:$0xff]
        %v341 = vld [vmem:[%s4] sm:$0x1]
        %v343 = vlaneseq
        %v344 = vshrl.u32 %v343, 7
        %v345 = vsub.s32 0, %v344
        %v346 = vrot.slane %v341, %v345
        %vm348 = vcmask 523264
        %v350 = vsel %vm348, %v332, 0
        %352 = vmatprep.subr.mxu0 0.0
        %353 = vmatpush1.msra.mxu0 %v333
        %354 = vmatprep.subr.mxu0 0.0
        %355 = vmatpush1.msra.mxu0 %v334
        %356 = vmatprep.subr.mxu0 0.0
        %357 = vmatpush1.msra.mxu0 %v335
        %358 = vmatprep.subr.mxu0 0.0
        %359 = vmatpush1.msra.mxu0 %v336
        %360 = vmatprep.subr.mxu0 0.0
        %361 = vmatpush1.msra.mxu0 %v337
        %362 = vmatprep.subr.mxu0 0.0
        %363 = vmatpush1.msra.mxu0 %v338
        %364 = vmatprep.subr.mxu0 0.0
        %365 = vmatpush1.msra.mxu0 %v339
        %366 = vmatprep.subr.mxu0 0.0
        %367 = vmatpush1.msra.mxu0 %v340
        %368 = vmatprep.subr.mxu0 0.0
        %369 = vmatpush1.msra.mxu0 0.0
        %370 = vmatprep.subr.mxu0 0.0
        %371 = vmatpush1.msra.mxu0 0.0
        %372 = vmatprep.subr.mxu0 0.0
        %373 = vmatpush1.msra.mxu0 0.0
        %374 = vmatprep.subr.mxu0 0.0
        %375 = vmatpush1.msra.mxu0 0.0
        %376 = vmatprep.subr.mxu0 0.0
        %377 = vmatpush1.msra.mxu0 0.0
        %378 = vmatprep.subr.mxu0 0.0
        %379 = vmatpush1.msra.mxu0 0.0
        %380 = vmatprep.subr.mxu0 0.0
        %381 = vmatpush1.msra.mxu0 0.0
        %382 = vmatprep.subr.mxu0 0.0
        %383 = vmatpush1.msra.mxu0 0.0
        %384 = vmatprep.subr.mxu0 0.0
        %385 = vmatpush1.msra.mxu0 0.0
        %386 = vmatprep.subr.mxu0 0.0
        %387 = vmatpush1.msra.mxu0 0.0
        %388 = vmatprep.subr.mxu0 0.0
        %389 = vmatpush1.msra.mxu0 0.0
        %390 = vmatprep.subr.mxu0 0.0
        %391 = vmatpush1.msra.mxu0 0.0
        %392 = vmatprep.subr.mxu0 0.0
        %393 = vmatpush1.msra.mxu0 0.0
        %394 = vmatprep.subr.mxu0 0.0
        %395 = vmatpush1.msra.mxu0 0.0
        %396 = vmatprep.subr.mxu0 0.0
        %397 = vmatpush1.msra.mxu0 0.0
        %398 = vmatprep.subr.mxu0 0.0
        %399 = vmatpush1.msra.mxu0 0.0
        %400 = vmatprep.subr.mxu0 0.0
        %401 = vmatpush1.msra.mxu0 0.0
        %402 = vmatprep.subr.mxu0 0.0
        %403 = vmatpush1.msra.mxu0 0.0
        %404 = vmatprep.subr.mxu0 0.0
        %405 = vmatpush1.msra.mxu0 0.0
        %406 = vmatprep.subr.mxu0 0.0
        %407 = vmatpush1.msra.mxu0 0.0
        %408 = vmatprep.subr.mxu0 0.0
        %409 = vmatpush1.msra.mxu0 0.0
        %410 = vmatprep.subr.mxu0 0.0
        %411 = vmatpush1.msra.mxu0 0.0
        %412 = vmatprep.subr.mxu0 0.0
        %413 = vmatpush1.msra.mxu0 0.0
        %414 = vmatprep.subr.mxu0 0.0
        %415 = vmatpush1.msra.mxu0 0.0
        %416 = vmatprep.mubr.f32.mxu0 0.0
        %417 = vmatmul.mubr.f32.gmra.mrb[0].mxu0 %v350
        %v418 = vpop.f32.mrb[0].mxu0
        %v419 = vadd.f32 %v346, %v418
        %v420 = vpop.f32.mrb[0].mxu0
        %421 = vdwg.mxu0
        %vm422 = vcmp.gt.f32.partialorder %v419, 0.0
        %v423 = vmul.f32 %v419, 0.01
        %v424 = vsel %vm422, %v419, %v423
        %v425 = vld [vmem:[#allocation5] sm:$0xff]
        %v426 = vld [vmem:[#allocation5 + $0x8] sm:$0xff]
        %v427 = vld [vmem:[#allocation5 + $0x10] sm:$0xff]
        %v428 = vld [vmem:[#allocation5 + $0x18] sm:$0xff]
        %v429 = vld [vmem:[#allocation5 + $0x20] sm:$0xff]
        %v430 = vld [vmem:[#allocation5 + $0x28] sm:$0xff]
        %v431 = vld [vmem:[#allocation5 + $0x30] sm:$0xff]
        %v432 = vld [vmem:[#allocation5 + $0x38] sm:$0xff]
        %v434 = vsel %vm348, %v424, 0
        %436 = vmatprep.subr.mxu0 0.0
        %437 = vmatpush1.msra.mxu0 %v425
        %438 = vmatprep.subr.mxu0 0.0
        %439 = vmatpush1.msra.mxu0 %v426
        %440 = vmatprep.subr.mxu0 0.0
        %441 = vmatpush1.msra.mxu0 %v427
        %442 = vmatprep.subr.mxu0 0.0
        %443 = vmatpush1.msra.mxu0 %v428
        %444 = vmatprep.subr.mxu0 0.0
        %445 = vmatpush1.msra.mxu0 %v429
        %446 = vmatprep.subr.mxu0 0.0
        %447 = vmatpush1.msra.mxu0 %v430
        %448 = vmatprep.subr.mxu0 0.0
        %449 = vmatpush1.msra.mxu0 %v431
        %450 = vmatprep.subr.mxu0 0.0
        %451 = vmatpush1.msra.mxu0 %v432
        %452 = vmatprep.subr.mxu0 0.0
        %453 = vmatpush1.msra.mxu0 0.0
        %454 = vmatprep.subr.mxu0 0.0
        %455 = vmatpush1.msra.mxu0 0.0
        %456 = vmatprep.subr.mxu0 0.0
        %457 = vmatpush1.msra.mxu0 0.0
        %458 = vmatprep.subr.mxu0 0.0
        %459 = vmatpush1.msra.mxu0 0.0
        %460 = vmatprep.subr.mxu0 0.0
        %461 = vmatpush1.msra.mxu0 0.0
        %462 = vmatprep.subr.mxu0 0.0
        %463 = vmatpush1.msra.mxu0 0.0
        %464 = vmatprep.subr.mxu0 0.0
        %465 = vmatpush1.msra.mxu0 0.0
        %466 = vmatprep.subr.mxu0 0.0
        %467 = vmatpush1.msra.mxu0 0.0
        %468 = vmatprep.subr.mxu0 0.0
        %469 = vmatpush1.msra.mxu0 0.0
        %470 = vmatprep.subr.mxu0 0.0
        %471 = vmatpush1.msra.mxu0 0.0
        %472 = vmatprep.subr.mxu0 0.0
        %473 = vmatpush1.msra.mxu0 0.0
        %474 = vmatprep.subr.mxu0 0.0
        %475 = vmatpush1.msra.mxu0 0.0
        %476 = vmatprep.subr.mxu0 0.0
        %477 = vmatpush1.msra.mxu0 0.0
        %478 = vmatprep.subr.mxu0 0.0
        %479 = vmatpush1.msra.mxu0 0.0
        %480 = vmatprep.subr.mxu0 0.0
        %481 = vmatpush1.msra.mxu0 0.0
        %482 = vmatprep.subr.mxu0 0.0
        %483 = vmatpush1.msra.mxu0 0.0
        %484 = vmatprep.subr.mxu0 0.0
        %485 = vmatpush1.msra.mxu0 0.0
        %486 = vmatprep.subr.mxu0 0.0
        %487 = vmatpush1.msra.mxu0 0.0
        %488 = vmatprep.subr.mxu0 0.0
        %489 = vmatpush1.msra.mxu0 0.0
        %490 = vmatprep.subr.mxu0 0.0
        %491 = vmatpush1.msra.mxu0 0.0
        %492 = vmatprep.subr.mxu0 0.0
        %493 = vmatpush1.msra.mxu0 0.0
        %494 = vmatprep.subr.mxu0 0.0
        %495 = vmatpush1.msra.mxu0 0.0
        %496 = vmatprep.subr.mxu0 0.0
        %497 = vmatpush1.msra.mxu0 0.0
        %498 = vmatprep.subr.mxu0 0.0
        %499 = vmatpush1.msra.mxu0 0.0
        %500 = vmatprep.mubr.f32.mxu0 0.0
        %501 = vmatmul.mubr.f32.gmra.mrb[0].mxu0 %v434
        %v502 = vpop.f32.mrb[0].mxu0
        %v503 = vadd.f32 0.0, %v502
        %v504 = vpop.f32.mrb[0].mxu0
        %505 = vdwg.mxu0
        %506 = vst [vmem:[%s272] sm:$0xff] %v503
        %s507 = sand.u32 %s161, 1
        %s508 = scalar_lea.sflag [#allocation4], %s507
        %s509 = sand.u32 %s161, 1
        %s510 = smul.addr %s509, 8
        %s511 = scalar_lea.vmem [#allocation7], %s510
        // Predicated region
        $region53: #{tpu_custom_call.1} parent=43 // pred_check
          %p512 = pneg %p171
        $region54: #{tpu_custom_call.1} parent=43 // pred_check_branch
          %514 = sbr.rel (%p512) target = $region56
        $region55: #{tpu_custom_call.1} parent=43 // pred_region
          %s516 = ssub.s32 128, 128
          %517 = vsyncadd %s508, %s516
          %s518 = smul.addr %s22, 128
          %s519 = scalar_lea.hbm %s6, %s518
          %s521 = sshll.u32 %s511, 4
          %s522 = int_to_ptr.vmem [resolvable:$true] %s521
          %524 = dma.vmem_to_hbm [thread:$0]  %s522, 128, %s519, %s508
        $region56: #{tpu_custom_call.1} parent=43 // pred_fallthru
          _
      $region44: #{tpu_custom_call.1} parent=5 // pred_fallthru
        _
      %p525 = scmp.le.s32.totalorder 2, %s17
      // Predicated region
      $region57: #{tpu_custom_call.1} parent=5 // pred_check
        %p526 = pneg %p525
      $region58: #{tpu_custom_call.1} parent=5 // pred_check_branch
        %528 = sbr.rel (%p526) target = $region60
      $region59: #{tpu_custom_call.1} parent=5 // pred_region
        %s529 = ssub.s32 %s17, 2
        // Predicated region
        $region61: #{tpu_custom_call.1} parent=59 // pred_check
          %p530 = pneg %p177
        $region62: #{tpu_custom_call.1} parent=59 // pred_check_branch
          %532 = sbr.rel (%p530) target = $region64
        $region63: #{tpu_custom_call.1} parent=59 // pred_region
          %s533 = sand.u32 %s162, 1
          %s534 = scalar_lea.sflag [#allocation4], %s533
          %s535 = sand.u32 %s162, 1
          %s536 = smul.addr %s535, 8
          %s537 = scalar_lea.vmem [#allocation7], %s536
          %538 = dma.done %s534, 128
        $region64: #{tpu_custom_call.1} parent=59 // pred_fallthru
          _
      $region60: #{tpu_custom_call.1} parent=5 // pred_fallthru
        _
    $region6: #{tpu_custom_call.1} parent=1 // loop_footer
      %s21 = sadd.s32 1, %s17
    $region7: #{tpu_custom_call.1} parent=1 // loop_footer_branch
      %16 = sbr.rel target = $region3
    $region8: #{tpu_custom_call.1} parent=1 // loop_exit
      _
    %539 = vsyncpa [#allocation3], 1
    %s540 = scalar_lea.sflag [#allocation3], 1
    %541 = vsyncpa %s540, 1
    %542 = vsyncpa [#allocation6], 1
    %543 = vsyncpa [#allocation4], 1
    %s544 = scalar_lea.sflag [#allocation4], 1
    %545 = vsyncpa %s544, 1

</llo_original>
